<compile_context>
chip_gen: v7x
topology: tpu7x:2x2x1
jax: 0.10.0
libtpu: 0.0.40
codegen_flags: <defaults>
</compile_context>

<pallas_src>
import functools

import jax
import jax.numpy as jnp
import numpy as np
from jax.experimental import pallas as pl
from jax.experimental.pallas import tpu as pltpu

# In-kernel MXU precision.  HIGHEST = f32-accurate multi-pass (safe, known to
# lower); DEFAULT = single-pass bf16 (~3-6x faster) when accuracy allows.
MM_PRECISION = jax.lax.Precision.HIGHEST
# XLA-side 7x7 conv: 3-pass bf16 (error ~1e-5, well inside the 1e-3 budget).
CONV_PRECISION = jax.lax.Precision.HIGH
# Reference precision (pure-JAX validation path).
REF_PRECISION = jax.lax.Precision.HIGHEST

_MAX_LANE_TILE = 4096   # lane-tile cap; ~Cp*TILE*4 bytes per buffer, fits v7x


def _choose_tile(hw, max_tile=_MAX_LANE_TILE):
    """Largest lane tile dividing hw: hw itself if small enough, else the
    biggest multiple of 128 <= max_tile that divides hw (fallback: hw)."""
    if hw <= max_tile:
        return hw
    for t in range(max_tile - max_tile % 128, 0, -128):
        if hw % t == 0:
            return t
    return hw


# --------------------------------------------------------------------------
# Pallas kernels
# --------------------------------------------------------------------------
def _gram_softmax_kernel(x_ref, wsp_ref, bsp_ref, nrm_ref, g_acc, *, c_real):
    """Pass 1: accumulate G = S @ S^T over HW tiles, softmax at last tile.

    x_ref   : (1, Cp, TILE)   channel-padded, channel-major input tile
    wsp_ref : (Cp, Cp)        spatial_proj 1x1 weight     bsp_ref : (Cp, 1)
    nrm_ref : (1, Cp, Cp)     softmax(gram) output (resident per batch elem)
    g_acc   : (Cp, Cp)        VMEM scratch accumulator
    """
    t = pl.program_id(1)

    @pl.when(t == 0)
    def _():
        g_acc[...] = jnp.zeros_like(g_acc)

    X = x_ref[0]                                             # (Cp, TILE)
    S = jnp.dot(wsp_ref[...], X, precision=MM_PRECISION,
                preferred_element_type=jnp.float32) + bsp_ref[...]
    g_acc[...] += jax.lax.dot_general(                       # S @ S^T
        S, S, (((1,), (1,)), ((), ())), precision=MM_PRECISION,
        preferred_element_type=jnp.float32)

    @pl.when(t == pl.num_programs(1) - 1)
    def _():
        G = g_acc[...]
        # Mask the zero-padded channel columns out of the softmax so the
        # padded layout is numerically identical to the unpadded math.
        col = jax.lax.broadcasted_iota(jnp.int32, G.shape, 1)
        G = jnp.where(col < c_real, G, -1e30)
        G = G - jnp.max(G, axis=-1, keepdims=True)
        E = jnp.exp(G)
        nrm_ref[0] = E / jnp.sum(E, axis=-1, keepdims=True)


def _spin_apply_kernel(x_ref, logits_ref, nw_ref, nb_ref, wc_ref, bc_ref,
                       out_ref):
    """Pass 2 (per HW tile), with weight products pre-folded in the wrapper:

        out = (NrmWsp @ X + Nrmb) * sigmoid(logits) + Wcomb @ X + bcomb

    x_ref      : (1, Cp, TILE)     logits_ref : (1, 1, TILE)
    nw_ref     : (1, Cp, Cp)  = Nrm @ Wsp      nb_ref : (1, Cp, 1) = Nrm @ bsp
    wc_ref     : (Cp, Cp)     = Wrv @ Win      bc_ref : (Cp, 1)    = Wrv@bin+brv
    """
    X = x_ref[0]                                             # (Cp, TILE)
    pspat = jnp.dot(nw_ref[0], X, precision=MM_PRECISION,
                    preferred_element_type=jnp.float32) + nb_ref[0]
    inter = jnp.dot(wc_ref[...], X, precision=MM_PRECISION,
                    preferred_element_type=jnp.float32) + bc_ref[...]
    attn = jax.nn.sigmoid(logits_ref[0])                     # (1, TILE)
    out_ref[0] = pspat * attn + inter


def _combine_kernel(w_ref, o1_ref, o2_ref, o3_ref, out_ref):
    """Pyramid weighted sum per lane tile (weights live in SMEM)."""
    out_ref[...] = (w_ref[0] * o1_ref[...]
                    + w_ref[1] * o2_ref[...]
                    + w_ref[2] * o3_ref[...])


# --------------------------------------------------------------------------
# JAX wrappers
# --------------------------------------------------------------------------
def _attn_logits(x, w7, b7, precision):
    """7x7 single-output-channel conv (pre-sigmoid).  (B,C,H,W) -> (B,1,H,W).
    Done in XLA: avoids the 49x im2col blow-up and an MXU-degenerate M=1
    matmul inside the kernel."""
    y = jax.lax.conv_general_dilated(
        x, w7, window_strides=(1, 1), padding=((3, 3), (3, 3)),
        dimension_numbers=('NCHW', 'OIHW', 'NCHW'), precision=precision)
    return y + b7[None, :, None, None]


def spin_module(x, p):
    """Pallas SPINModule forward.  x: (B, C, H, W) float32 -> (B, C, H, W)."""
    B, C, H, W = x.shape
    HW = H * W
    Cp = max(8, ((C + 7) // 8) * 8)          # channel pad to 8 sublanes
    TILE = _choose_tile(HW)
    T = HW // TILE

    x_flat = x.reshape(B, C, HW)
    if Cp != C:
        x_flat = jnp.pad(x_flat, ((0, 0), (0, Cp - C), (0, 0)))

    def pad_w(w):                            # (C,C,1,1) -> (Cp,Cp)
        return jnp.pad(w[:, :, 0, 0], ((0, Cp - C), (0, Cp - C)))

    def pad_b(b):                            # (C,) -> (Cp,1)
        return jnp.pad(b, (0, Cp - C)).reshape(Cp, 1)

    wsp, bsp = pad_w(p['wsp']), pad_b(p['bsp'])
    win, bin_ = pad_w(p['win']), pad_b(p['bin'])
    wrv, brv = pad_w(p['wrv']), pad_b(p['brv'])

    logits = _attn_logits(x, p['w7'], p['b7'],
                          CONV_PRECISION).reshape(B, 1, HW)

    def const(shape):                        # weights: constant index -> resident
        return pl.BlockSpec(shape, lambda b, t: (0,) * len(shape))

    # ---- Pass 1: gram accumulation over HW tiles + softmax at the last tile.
    nrm = pl.pallas_call(
        functools.partial(_gram_softmax_kernel, c_real=C),
        out_shape=jax.ShapeDtypeStruct((B, Cp, Cp), jnp.float32),
        grid=(B, T),
        in_specs=[pl.BlockSpec((1, Cp, TILE), lambda b, t: (b, 0, t)),
                  const((Cp, Cp)), const((Cp, 1))],
        out_specs=pl.BlockSpec((1, Cp, Cp), lambda b, t: (b, 0, 0)),
        scratch_shapes=[pltpu.VMEM((Cp, Cp), jnp.float32)],
        compiler_params=pltpu.CompilerParams(
            dimension_semantics=("parallel", "arbitrary")),
        cost_estimate=pl.CostEstimate(
            flops=4 * B * Cp * Cp * HW,
            transcendentals=B * Cp * Cp,
            bytes_accessed=4 * (B * Cp * HW + B * Cp * Cp + 2 * Cp * Cp)),
    )(x_flat, wsp, bsp)

    # ---- Fold the (C,C) weight products out of the per-pixel pass (exact
    # algebra; only fp rounding differs).  These are tiny XLA matmuls.
    nrm_wsp = jnp.einsum('bij,jk->bik', nrm, wsp, precision=REF_PRECISION)
    nrm_bsp = jnp.einsum('bij,jk->bik', nrm, bsp, precision=REF_PRECISION)
    wcomb = jnp.dot(wrv, win, precision=REF_PRECISION)
    bcomb = jnp.dot(wrv, bin_, precision=REF_PRECISION) + brv

    # ---- Pass 2: per-tile spatial projection + inter path + attention mul.
    # NOTE: at toy sizes the low-res pyramid levels have HW < 128 lanes, so
    # output stores are masked; packing batch elements along lanes would fix
    # that for tiny inputs but is not worth the complexity here.
    out_flat = pl.pallas_call(
        _spin_apply_kernel,
        out_shape=jax.ShapeDtypeStruct((B, Cp, HW), jnp.float32),
        grid=(B, T),
        in_specs=[pl.BlockSpec((1, Cp, TILE), lambda b, t: (b, 0, t)),
                  pl.BlockSpec((1, 1, TILE), lambda b, t: (b, 0, t)),
                  pl.BlockSpec((1, Cp, Cp), lambda b, t: (b, 0, 0)),
                  pl.BlockSpec((1, Cp, 1), lambda b, t: (b, 0, 0)),
                  const((Cp, Cp)), const((Cp, 1))],
        out_specs=pl.BlockSpec((1, Cp, TILE), lambda b, t: (b, 0, t)),
        compiler_params=pltpu.CompilerParams(
            dimension_semantics=("parallel", "parallel")),
        cost_estimate=pl.CostEstimate(
            flops=4 * B * Cp * Cp * HW,
            transcendentals=B * HW,
            bytes_accessed=4 * (2 * B * Cp * HW + B * HW + B * Cp * Cp)),
    )(x_flat, logits, nrm_wsp, nrm_bsp, wcomb, bcomb)

    return out_flat[:, :C, :].reshape(B, C, H, W)


def weighted_combine(w, o1, o2, o3):
    """out = w0*o1 + w1*o2 + w2*o3, lane-tiled & pipelined, weights in SMEM."""
    B, C, H, W = o1.shape
    HW = H * W
    TILE = _choose_tile(HW, max_tile=2048)
    T = HW // TILE
    flat = lambda o: o.reshape(B, C, HW)
    tile_spec = lambda: pl.BlockSpec((1, C, TILE), lambda b, t: (b, 0, t))
    out = pl.pallas_call(
        _combine_kernel,
        out_shape=jax.ShapeDtypeStruct((B, C, HW), jnp.float32),
        grid=(B, T),
        in_specs=[pl.BlockSpec(memory_space=pltpu.MemorySpace.SMEM),
                  tile_spec(), tile_spec(), tile_spec()],
        out_specs=tile_spec(),
        compiler_params=pltpu.CompilerParams(
            dimension_semantics=("parallel", "parallel")),
    )(w, flat(o1), flat(o2), flat(o3))
    return out.reshape(B, C, H, W)


def spin_pyramid(x, params):
    """SPINPyramid forward.  x: (B, C, H, W) float32."""
    B, C, H, W = x.shape
    # TODO(synk): F.interpolate (bilinear, align_corners=False, no antialias)
    # is pure data movement; kept in plain JAX via jax.image.resize
    # (half-pixel convention assumed equivalent, not re-verified vs torch).
    resize = functools.partial(jax.image.resize, method='bilinear',
                               antialias=False)
    x_half = resize(x, (B, C, H // 2, W // 2))
    x_quarter = resize(x, (B, C, H // 4, W // 4))

    out1 = spin_module(x, params['spin1'])
    out2 = resize(spin_module(x_half, params['spin2']), (B, C, H, W))
    out3 = resize(spin_module(x_quarter, params['spin3']), (B, C, H, W))
    return weighted_combine(params['weights'], out1, out2, out3)


# --------------------------------------------------------------------------
# Pure-JAX reference (same semantics as the PyTorch module) for validation
# --------------------------------------------------------------------------
def _spin_module_ref(x, p):
    B, C, H, W = x.shape

    def conv1x1(xx, w, b):
        return (jnp.einsum('oi,bihw->bohw', w[:, :, 0, 0], xx,
                           precision=REF_PRECISION)
                + b[None, :, None, None])

    spatial_out = conv1x1(x, p['wsp'], p['bsp'])
    sf = spatial_out.reshape(B, C, H * W)
    gram = jnp.einsum('bik,bjk->bij', sf, sf, precision=REF_PRECISION)
    norm = jax.nn.softmax(gram, axis=-1)
    spatial_proj = jnp.einsum('bij,bjk->bik', norm, sf,
                              precision=REF_PRECISION).reshape(B, C, H, W)
    inter = conv1x1(conv1x1(x, p['win'], p['bin']), p['wrv'], p['brv'])
    attn = jax.nn.sigmoid(_attn_logits(x, p['w7'], p['b7'], REF_PRECISION))
    return spatial_proj * attn + inter


def _spin_pyramid_ref(x, params):
    B, C, H, W = x.shape
    resize = functools.partial(jax.image.resize, method='bilinear',
                               antialias=False)
    out1 = _spin_module_ref(x, params['spin1'])
    out2 = resize(_spin_module_ref(resize(x, (B, C, H // 2, W // 2)),
                                   params['spin2']), (B, C, H, W))
    out3 = resize(_spin_module_ref(resize(x, (B, C, H // 4, W // 4)),
                                   params['spin3']), (B, C, H, W))
    w = params['weights']
    return w[0] * out1 + w[1] * out2 + w[2] * out3


# --------------------------------------------------------------------------
# Deterministic parameter init (shapes follow SPINModule.__init__)
# --------------------------------------------------------------------------
def init_spin_params(key, C):
    ks = jax.random.split(key, 8)

    def conv_w(k, o, i, kh, kw):
        bound = 1.0 / np.sqrt(i * kh * kw)
        return jax.random.uniform(k, (o, i, kh, kw), jnp.float32, -bound, bound)

    def conv_b(k, o, fan_in):
        bound = 1.0 / np.sqrt(fan_in)
        return jax.random.uniform(k, (o,), jnp.float32, -bound, bound)

    return {
        'wsp': conv_w(ks[0], C, C, 1, 1), 'bsp': conv_b(ks[1], C, C),
        'win': conv_w(ks[2], C, C, 1, 1), 'bin': conv_b(ks[3], C, C),
        'wrv': conv_w(ks[4], C, C, 1, 1), 'brv': conv_b(ks[5], C, C),
        'w7':  conv_w(ks[6], 1, C, 7, 7), 'b7':  conv_b(ks[7], 1, C * 49),
    }


if __name__ == "__main__":
    key = jax.random.PRNGKey(0)
    kx, k1, k2, k3 = jax.random.split(key, 4)

    B, C, H, W = 2, 4, 16, 16
    x = jax.random.normal(kx, (B, C, H, W), jnp.float32)

    params = {
        'spin1': init_spin_params(k1, C),
        'spin2': init_spin_params(k2, C),
        'spin3': init_spin_params(k3, C),
        'weights': jnp.ones((3,), jnp.float32),   # nn.Parameter(torch.ones(3))
    }

    out = jax.block_until_ready(spin_pyramid(x, params))
    ref = jax.block_until_ready(_spin_pyramid_ref(x, params))
    np.testing.assert_allclose(np.asarray(out), np.asarray(ref),
                               rtol=1e-3, atol=1e-3)
    print("KERNEL_OK")
</pallas_src>

<mosaic_0001>
module attributes {stable_mosaic.version = 11 : i64} {
  func.func @_gram_softmax_kernel(%arg0: i32, %arg1: i32, %arg2: memref<1x8x256xf32, #tpu.memory_space<vmem>>, %arg3: memref<8x8xf32, #tpu.memory_space<vmem>>, %arg4: memref<8x1xf32, #tpu.memory_space<vmem>>, %arg5: memref<1x8x8xf32, #tpu.memory_space<vmem>>, %arg6: memref<8x8xf32, #tpu.memory_space<vmem>>) attributes {dimension_semantics = [#tpu.dimension_semantics<parallel>, #tpu.dimension_semantics<arbitrary>], iteration_bounds = array<i64: 2, 1>, scalar_prefetch = 0 : i64, scratch_operands = 1 : i64, tpu.core_type = #tpu.core_type<tc>, window_params = [{transform_indices = @transform_0, window_bounds = array<i64: 1, 8, 256>}, {pipeline_mode = #tpu.pipeline_mode<synchronous>, transform_indices = @transform_1, window_bounds = array<i64: 8, 8>}, {pipeline_mode = #tpu.pipeline_mode<synchronous>, transform_indices = @transform_2, window_bounds = array<i64: 8, 1>}, {transform_indices = @transform_3, window_bounds = array<i64: 1, 8, 8>}]} {
    %c0_i32 = arith.constant 0 : i32
    %0 = arith.cmpi eq, %arg1, %c0_i32 : i32
    %1 = arith.extui %0 : i1 to i32
    %c0_i32_0 = arith.constant 0 : i32
    %2 = arith.cmpi ne, %1, %c0_i32_0 : i32
    scf.if %2 {
      %cst_14 = arith.constant 0.000000e+00 : f32
      %17 = vector.broadcast %cst_14 : f32 to vector<8x8xf32>
      %c0_15 = arith.constant 0 : index
      %c0_16 = arith.constant 0 : index
      %18 = vector.load %arg6[%c0_15, %c0_16] : memref<8x8xf32, #tpu.memory_space<vmem>>, vector<8x8xf32>
      tpu.vector_store %arg6[%c0_15, %c0_16], %17 {strides = array<i32>} : memref<8x8xf32, #tpu.memory_space<vmem>>, vector<8x8xf32>,
    } else {
    }
    %c0 = arith.constant 0 : index
    %c0_1 = arith.constant 0 : index
    %c0_2 = arith.constant 0 : index
    %3 = vector.load %arg2[%c0, %c0_1, %c0_2] : memref<1x8x256xf32, #tpu.memory_space<vmem>>, vector<1x8x256xf32>
    %4 = vector.shape_cast %3 : vector<1x8x256xf32> to vector<8x256xf32>
    %c0_3 = arith.constant 0 : index
    %c0_4 = arith.constant 0 : index
    %5 = vector.load %arg3[%c0_3, %c0_4] : memref<8x8xf32, #tpu.memory_space<vmem>>, vector<8x8xf32>
    %cst = arith.constant dense<0.000000e+00> : vector<8x256xf32>
    %6 = tpu.matmul %5, %4, %cst {dimension_numbers = #tpu.dot_dimension_numbers<[1], [0], [0], [1], [0, 0, 1, 1], [], []>, precision = #tpu.contract_precision<fp32>} : vector<8x8xf32>, vector<8x256xf32>, vector<8x256xf32> -> vector<8x256xf32>
    %c0_5 = arith.constant 0 : index
    %c0_6 = arith.constant 0 : index
    %7 = vector.load %arg4[%c0_5, %c0_6] : memref<8x1xf32, #tpu.memory_space<vmem>>, vector<8x1xf32>
    %8 = vector.broadcast %7 : vector<8x1xf32> to vector<8x256xf32>
    %9 = arith.addf %6, %8 : vector<8x256xf32>
    %c0_7 = arith.constant 0 : index
    %c0_8 = arith.constant 0 : index
    %10 = vector.load %arg6[%c0_7, %c0_8] : memref<8x8xf32, #tpu.memory_space<vmem>>, vector<8x8xf32>
    %cst_9 = arith.constant dense<0.000000e+00> : vector<8x8xf32>
    %11 = tpu.matmul %9, %9, %cst_9 {dimension_numbers = #tpu.dot_dimension_numbers<[1], [1], [0], [0], [0, 0, 1, 0], [], []>, precision = #tpu.contract_precision<fp32>} : vector<8x256xf32>, vector<8x256xf32>, vector<8x8xf32> -> vector<8x8xf32>
    %12 = arith.addf %10, %11 : vector<8x8xf32>
    %c0_10 = arith.constant 0 : index
    %c0_11 = arith.constant 0 : index
    %13 = vector.load %arg6[%c0_10, %c0_11] : memref<8x8xf32, #tpu.memory_space<vmem>>, vector<8x8xf32>
    tpu.vector_store %arg6[%c0_10, %c0_11], %12 {strides = array<i32>} : memref<8x8xf32, #tpu.memory_space<vmem>>, vector<8x8xf32>,
    %c0_i32_12 = arith.constant 0 : i32
    %14 = arith.cmpi eq, %arg1, %c0_i32_12 : i32
    %15 = arith.extui %14 : i1 to i32
    %c0_i32_13 = arith.constant 0 : i32
    %16 = arith.cmpi ne, %15, %c0_i32_13 : i32
    scf.if %16 {
      %c0_14 = arith.constant 0 : index
      %c0_15 = arith.constant 0 : index
      %17 = vector.load %arg6[%c0_14, %c0_15] : memref<8x8xf32, #tpu.memory_space<vmem>>, vector<8x8xf32>
      %18 = tpu.iota {dimensions = array<i32: 1>} : vector<8x8xi32>
      %c4_i32 = arith.constant 4 : i32
      %19 = vector.broadcast %c4_i32 : i32 to vector<8x8xi32>
      %20 = arith.cmpi slt, %18, %19 : vector<8x8xi32>
      %cst_16 = arith.constant -1.000000e+30 : f32
      %21 = vector.broadcast %cst_16 : f32 to vector<8x8xf32>
      %22 = arith.select %20, %17, %21 : vector<8x8xi1>, vector<8x8xf32>
      %cst_17 = arith.constant dense<0xFF800000> : vector<8xf32>
      %23 = vector.multi_reduction <maximumf>, %22, %cst_17 [1] : vector<8x8xf32> to vector<8xf32>
      %24 = vector.shape_cast %23 : vector<8xf32> to vector<8x1xf32>
      %25 = vector.broadcast %24 : vector<8x1xf32> to vector<8x8xf32>
      %26 = arith.subf %22, %25 : vector<8x8xf32>
      %27 = math.exp %26 : vector<8x8xf32>
      %cst_18 = arith.constant dense<0.000000e+00> : vector<8xf32>
      %28 = vector.multi_reduction <add>, %27, %cst_18 [1] : vector<8x8xf32> to vector<8xf32>
      %29 = vector.shape_cast %28 : vector<8xf32> to vector<8x1xf32>
      %30 = vector.broadcast %29 : vector<8x1xf32> to vector<8x8xf32>
      %31 = arith.divf %27, %30 : vector<8x8xf32>
      %c0_19 = arith.constant 0 : index
      %c0_20 = arith.constant 0 : index
      %c0_21 = arith.constant 0 : index
      %32 = vector.load %arg5[%c0_19, %c0_20, %c0_21] : memref<1x8x8xf32, #tpu.memory_space<vmem>>, vector<1x8x8xf32>
      %33 = vector.shape_cast %32 : vector<1x8x8xf32> to vector<8x8xf32>
      %34 = vector.shape_cast %31 : vector<8x8xf32> to vector<1x8x8xf32>
      tpu.vector_store %arg5[%c0_19, %c0_20, %c0_21], %34 {strides = array<i32>} : memref<1x8x8xf32, #tpu.memory_space<vmem>>, vector<1x8x8xf32>,
    } else {
    }
    return
  }
  func.func @transform_0(%arg0: i32, %arg1: i32) -> (i32, i32, i32) {
    %c0_i32 = arith.constant 0 : i32
    %c0_i32_0 = arith.constant 0 : i32
    return %arg0, %c0_i32, %arg1 : i32, i32, i32
  }
  func.func @transform_1(%arg0: i32, %arg1: i32) -> (i32, i32) {
    %c0_i32 = arith.constant 0 : i32
    %c0_i32_0 = arith.constant 0 : i32
    %c0_i32_1 = arith.constant 0 : i32
    return %c0_i32, %c0_i32_0 : i32, i32
  }
  func.func @transform_2(%arg0: i32, %arg1: i32) -> (i32, i32) {
    %c0_i32 = arith.constant 0 : i32
    %c0_i32_0 = arith.constant 0 : i32
    %c0_i32_1 = arith.constant 0 : i32
    return %c0_i32, %c0_i32_0 : i32, i32
  }
  func.func @transform_3(%arg0: i32, %arg1: i32) -> (i32, i32, i32) {
    %c0_i32 = arith.constant 0 : i32
    %c0_i32_0 = arith.constant 0 : i32
    %c0_i32_1 = arith.constant 0 : i32
    return %arg0, %c0_i32, %c0_i32_0 : i32, i32, i32
  }
}

</mosaic_0001>

<llo_original>
// kernel: tpu_custom_call.1
$region0: #{tpu_custom_call.1}
  #allocation0 [shape = 'u32[]', space=smem, size = 0x4, offset = 0x4, fixed_abs, tag = 'smem constant byte address 0x4 - core index']
  #allocation1 [shape = 'u32[144,128]{1,0:T(1,128)}', space=vmem, size = 0x12000, scoped, tag = 'internal scratch']
  #allocation2 [shape = 'f32[8,8]{1,0:T(8,128)}', space=vmem, size = 0x1000, scoped, tag = 'scratch operand']
  %s0 = inlined_call_operand.hbm [shape: f32[2,8,256], index: 0, kind: input, shape index: {}]
  %s1 = inlined_call_operand.vmem [shape: f32[8,8], index: 1, kind: input, shape index: {}]
  %s2 = inlined_call_operand.vmem [shape: f32[8,1], index: 2, kind: input, shape index: {}]
  %s3 = inlined_call_operand.hbm [shape: f32[2,8,8], index: 3, kind: output, shape index: {}]
  %s4 = sld [smem:[#allocation0]]
  $region57: #{tpu_custom_call.1} parent=0
    _
  %s6 = ssub.s32 1, %s4
  %s7 = scalar_select 0, %s6, %s4
  $region1: #{tpu_custom_call.1} parent=0
    #allocation3 [shape = 'u8[16384]{0}', space=vmem, size = 0x4000, scoped, tag = 'input window, operand 0']
    #allocation4 [shape = 's32[2]{0}', space=sflag, size = 0x8, scoped, tag = 'scoped memory for tpu_custom_call.1']
    #allocation5 [shape = 's32[2]{0}', space=sflag, size = 0x8, scoped, tag = 'scoped memory for tpu_custom_call.1']
    #allocation6 [shape = 'u8[8192]{0}', space=vmem, size = 0x2000, scoped, tag = 'output window, operand 0']
    %8 = vsyncpa [#allocation4], 0
    %s9 = scalar_lea.sflag [#allocation4], 1
    %10 = vsyncpa %s9, 0
    %11 = vsyncpa [#allocation5], 0
    %s12 = scalar_lea.sflag [#allocation5], 1
    %13 = vsyncpa %s12, 0
    loop: start=0, step=1, limit=4
    $region2: #{tpu_custom_call.1} parent=1 // loop_pre_header
      _
    $region3: #{tpu_custom_call.1} parent=1 // loop_header
      %s15 = sphi 0, %s19
      %p16 = scmp.ge.s32.totalorder %s15, 4
      %s22 = sphi 0, %s34
      %s23 = sphi 0, %s30
      %s24 = sphi 0, %s22
      %s25 = sphi 0, %s23
      %s26 = sphi 0, %s24
      %s27 = sphi 0, %s25
      %s39 = sphi 0, %s41
      %s42 = sphi 0, %s39
      %s43 = sphi 0, %s42
      %s59 = sphi 0, %s43
      %s63 = sphi 0, %s63
      %s65 = sphi 0, %s63
      %s66 = sphi 0, %s65
      %s80 = sphi 0, %s66
      %s84 = sphi 0, %s84
      %s86 = sphi 0, %s84
      %s87 = sphi 0, %s86
      %s101 = sphi 0, %s87
      %s107 = sphi 0, %s109
      %s110 = sphi 0, %s107
      %s111 = sphi 0, %s110
      %s127 = sphi 0, %s111
    $region4: #{tpu_custom_call.1} parent=1 // loop_header_branch
      %18 = sbr.rel (%p16) target = $region8
    $region5: #{tpu_custom_call.1} parent=1 // loop_body
      %s20 = ssub.s32 %s15, 1
      %s21 = ssub.s32 %s15, 2
      %s28 = sadd.s32 1, %s23
      %p29 = scmp.ge.s32.totalorder %s28, 1
      %s30 = scalar_select %p29, 0, %s28
      %s31 = sadd.s32 1, %s22
      %s32 = scalar_select %p29, %s31, %s22
      %p33 = scmp.ge.s32.totalorder %s32, 2
      %s34 = scalar_select %p33, 0, %s32
      %s35 = ssub.s32 %s22, %s34
      %s36 = ssub.s32 %s23, %s30
      %s37 = sor.u32 %s35, %s36
      %p38 = scmp.eq.s32.totalorder %s37, 0
      %s40 = sadd.s32 %s39, 1
      %s41 = scalar_select %p38, %s39, %s40
      %p44 = pneg %p38
      %p45 = scmp.eq.s32.totalorder %s15, 1
      %p46 = por %p44, %p45
      %p47 = scmp.ne.s32.totalorder %s39, %s42
      %p48 = scmp.eq.s32.totalorder %s15, 0
      %p49 = por %p47, %p48
      %p50 = scmp.ne.s32.totalorder %s39, %s42
      %p51 = scmp.eq.s32.totalorder %s20, 1
      %p52 = por %p50, %p51
      %p53 = scmp.ne.s32.totalorder %s42, %s43
      %p54 = scmp.eq.s32.totalorder %s20, 0
      %p55 = por %p53, %p54
      %p56 = scmp.ne.s32.totalorder %s42, %s43
      %p57 = scmp.eq.s32.totalorder %s21, 1
      %p58 = por %p56, %p57
      %p60 = scmp.ne.s32.totalorder %s43, %s59
      %p61 = scmp.eq.s32.totalorder %s21, 0
      %p62 = por %p60, %p61
      %s64 = sadd.s32 %s63, 1
      %p67 = scmp.eq.s32.totalorder %s15, 1
      %p68 = scmp.ne.s32.totalorder %s63, %s65
      %p69 = scmp.eq.s32.totalorder %s15, 0
      %p70 = por %p68, %p69
      %p71 = scmp.ne.s32.totalorder %s63, %s65
      %p72 = scmp.eq.s32.totalorder %s20, 1
      %p73 = por %p71, %p72
      %p74 = scmp.ne.s32.totalorder %s65, %s66
      %p75 = scmp.eq.s32.totalorder %s20, 0
      %p76 = por %p74, %p75
      %p77 = scmp.ne.s32.totalorder %s65, %s66
      %p78 = scmp.eq.s32.totalorder %s21, 1
      %p79 = por %p77, %p78
      %p81 = scmp.ne.s32.totalorder %s66, %s80
      %p82 = scmp.eq.s32.totalorder %s21, 0
      %p83 = por %p81, %p82
      %s85 = sadd.s32 %s84, 1
      %p88 = scmp.eq.s32.totalorder %s15, 1
      %p89 = scmp.ne.s32.totalorder %s84, %s86
      %p90 = scmp.eq.s32.totalorder %s15, 0
      %p91 = por %p89, %p90
      %p92 = scmp.ne.s32.totalorder %s84, %s86
      %p93 = scmp.eq.s32.totalorder %s20, 1
      %p94 = por %p92, %p93
      %p95 = scmp.ne.s32.totalorder %s86, %s87
      %p96 = scmp.eq.s32.totalorder %s20, 0
      %p97 = por %p95, %p96
      %p98 = scmp.ne.s32.totalorder %s86, %s87
      %p99 = scmp.eq.s32.totalorder %s21, 1
      %p100 = por %p98, %p99
      %p102 = scmp.ne.s32.totalorder %s87, %s101
      %p103 = scmp.eq.s32.totalorder %s21, 0
      %p104 = por %p102, %p103
      %s105 = ssub.s32 %s22, %s34
      %p106 = scmp.eq.s32.totalorder %s105, 0
      %s108 = sadd.s32 %s107, 1
      %s109 = scalar_select %p106, %s107, %s108
      %p112 = pneg %p106
      %p113 = scmp.eq.s32.totalorder %s15, 1
      %p114 = por %p112, %p113
      %p115 = scmp.ne.s32.totalorder %s107, %s110
      %p116 = scmp.eq.s32.totalorder %s15, 0
      %p117 = por %p115, %p116
      %p118 = scmp.ne.s32.totalorder %s107, %s110
      %p119 = scmp.eq.s32.totalorder %s20, 1
      %p120 = por %p118, %p119
      %p121 = scmp.ne.s32.totalorder %s110, %s111
      %p122 = scmp.eq.s32.totalorder %s20, 0
      %p123 = por %p121, %p122
      %p124 = scmp.ne.s32.totalorder %s110, %s111
      %p125 = scmp.eq.s32.totalorder %s21, 1
      %p126 = por %p124, %p125
      %p128 = scmp.ne.s32.totalorder %s111, %s127
      %p129 = scmp.eq.s32.totalorder %s21, 0
      %p130 = por %p128, %p129
      %p131 = scmp.le.s32.totalorder 1, %s15
      %p132 = scmp.lt.s32.totalorder %s15, 3
      %p133 = pnand %p131, %p132
      %p134 = pneg %p133
      // Predicated region
      $region9: #{tpu_custom_call.1} parent=5 // pred_check
        _
      $region10: #{tpu_custom_call.1} parent=5 // pred_check_branch
        %136 = sbr.rel (%p133) target = $region12
      $region11: #{tpu_custom_call.1} parent=5 // pred_region
        %s137 = ssub.s32 %s15, 1
        // Predicated region
        $region13: #{tpu_custom_call.1} parent=11 // pred_check
          %p138 = pneg %p76
        $region14: #{tpu_custom_call.1} parent=11 // pred_check_branch
          %140 = sbr.rel (%p138) target = $region16
        $region15: #{tpu_custom_call.1} parent=11 // pred_region
          _
        $region16: #{tpu_custom_call.1} parent=11 // pred_fallthru
          _
        // Predicated region
        $region17: #{tpu_custom_call.1} parent=11 // pred_check
          %p141 = pneg %p97
        $region18: #{tpu_custom_call.1} parent=11 // pred_check_branch
          %143 = sbr.rel (%p141) target = $region20
        $region19: #{tpu_custom_call.1} parent=11 // pred_region
          _
        $region20: #{tpu_custom_call.1} parent=11 // pred_fallthru
          _
      $region12: #{tpu_custom_call.1} parent=5 // pred_fallthru
        _
      %p144 = scmp.lt.s32.totalorder %s15, 2
      // Predicated region
      $region21: #{tpu_custom_call.1} parent=5 // pred_check
        %p145 = pneg %p144
      $region22: #{tpu_custom_call.1} parent=5 // pred_check_branch
        %147 = sbr.rel (%p145) target = $region24
      $region23: #{tpu_custom_call.1} parent=5 // pred_region
        // Predicated region
        $region25: #{tpu_custom_call.1} parent=23 // pred_check
          %p148 = pneg %p49
        $region26: #{tpu_custom_call.1} parent=23 // pred_check_branch
          %150 = sbr.rel (%p148) target = $region28
        $region27: #{tpu_custom_call.1} parent=23 // pred_region
          %s151 = sand.u32 %s39, 1
          %s152 = scalar_lea.sflag [#allocation4], %s151
          %s153 = sand.u32 %s39, 1
          %s154 = smul.addr %s153, 16
          %s155 = scalar_lea.vmem [#allocation3], %s154
          %s156 = smul.u32 2, %s23
          %s158 = ssub.s32 256, 256
          %159 = vsyncadd %s152, %s158
          %s160 = smul.addr %s22, 2
          %s161 = sadd.s32 %s156, %s160
          %s162 = smul.addr %s161, 128
          %s163 = scalar_lea.hbm %s0, %s162
          %s165 = sshll.u32 %s155, 4
          %s166 = int_to_ptr.vmem [resolvable:$true] %s165
          %168 = dma.hbm_to_vmem [thread:$0]  %s163, 256, %s166, %s152
        $region28: #{tpu_custom_call.1} parent=23 // pred_fallthru
          _
      $region24: #{tpu_custom_call.1} parent=5 // pred_fallthru
        _
      %p169 = scmp.le.s32.totalorder 1, %s15
      %p170 = scmp.lt.s32.totalorder %s15, 3
      %p171 = pnand %p169, %p170
      %p172 = pneg %p171
      // Predicated region
      $region29: #{tpu_custom_call.1} parent=5 // pred_check
        _
      $region30: #{tpu_custom_call.1} parent=5 // pred_check_branch
        %174 = sbr.rel (%p171) target = $region32
      $region31: #{tpu_custom_call.1} parent=5 // pred_region
        %s175 = ssub.s32 %s15, 1
        %s176 = sand.u32 %s42, 1
        %s177 = scalar_lea.sflag [#allocation4], %s176
        %s178 = sand.u32 %s42, 1
        %s179 = smul.addr %s178, 16
        %s180 = scalar_lea.vmem [#allocation3], %s179
        // Predicated region
        $region33: #{tpu_custom_call.1} parent=31 // pred_check
          %p181 = pneg %p55
        $region34: #{tpu_custom_call.1} parent=31 // pred_check_branch
          %183 = sbr.rel (%p181) target = $region36
        $region35: #{tpu_custom_call.1} parent=31 // pred_region
          %184 = dma.done %s177, 256
        $region36: #{tpu_custom_call.1} parent=31 // pred_fallthru
          _
        %s185 = sand.u32 %s42, 1
        %s186 = scalar_lea.sflag [#allocation4], %s185
        %s187 = sand.u32 %s42, 1
        %s188 = smul.addr %s187, 16
        %s189 = scalar_lea.vmem [#allocation3], %s188
        %p190 = pneg %p55
        %p191 = pneg %p52
        %p192 = pneg %p76
        %p193 = pneg %p73
        %p194 = pneg %p97
        %p195 = pneg %p94
        %p196 = pneg %p123
        %p197 = pneg %p120
        %s198 = sand.u32 %s110, 1
        %s199 = scalar_lea.sflag [#allocation5], %s198
        %s200 = sand.u32 %s110, 1
        %s201 = smul.addr %s200, 8
        %s202 = scalar_lea.vmem [#allocation6], %s201
        %s203 = smul.u32 2, %s25
        %p204 = scmp.eq.s32.totalorder %s25, 0
        // Predicated region
        $region37: #{tpu_custom_call.1} parent=31 // pred_check
          %p205 = pneg %p204
        $region38: #{tpu_custom_call.1} parent=31 // pred_check_branch
          %207 = sbr.rel (%p205) target = $region40
        $region39: #{tpu_custom_call.1} parent=31 // pred_region
          %vm208 = vcmask 64512
          %209 = vst.msk [vmem:[#allocation2] sm:$0xff] %vm208, 0.0
        $region40: #{tpu_custom_call.1} parent=31 // pred_fallthru
          _
        %v210 = vld [vmem:[%s180] sm:$0xff]
        %v211 = vld [vmem:[%s180 + $0x8] sm:$0xff]
        %v212 = vld [vmem:[%s1] sm:$0xff]
        %v213 = vld [vmem:[%s2] sm:$0xff]
        %215 = vset.pattern.permute.xlu0 0
        %216 = vperm.xlu0 %215, %v213
        %v217 = vpop.permute.xlu0 %216
        %vm219 = vcmask 64512
        %v221 = vsel %vm219, %v212, 0
        %v223 = vand.u32 %v211, 4294901760
        %224 = vmatprep.subr.mxu0 %v223
        %v225 = vand.u32 %v210, 4294901760
        %226 = vmatpush1.msra.mxu0 %v225
        %227 = vmatprep.subr.mxu0 0.0
        %228 = vmatpush1.msra.mxu0 0.0
        %229 = vmatprep.subr.mxu0 0.0
        %230 = vmatpush1.msra.mxu0 0.0
        %231 = vmatprep.subr.mxu0 0.0
        %232 = vmatpush1.msra.mxu0 0.0
        %233 = vmatprep.subr.mxu0 0.0
        %234 = vmatpush1.msra.mxu0 0.0
        %235 = vmatprep.subr.mxu0 0.0
        %236 = vmatpush1.msra.mxu0 0.0
        %237 = vmatprep.subr.mxu0 0.0
        %238 = vmatpush1.msra.mxu0 0.0
        %239 = vmatprep.subr.mxu0 0.0
        %240 = vmatpush1.msra.mxu0 0.0
        %241 = vmatprep.subr.mxu0 0.0
        %242 = vmatpush1.msra.mxu0 0.0
        %243 = vmatprep.subr.mxu0 0.0
        %244 = vmatpush1.msra.mxu0 0.0
        %245 = vmatprep.subr.mxu0 0.0
        %246 = vmatpush1.msra.mxu0 0.0
        %247 = vmatprep.subr.mxu0 0.0
        %248 = vmatpush1.msra.mxu0 0.0
        %249 = vmatprep.subr.mxu0 0.0
        %250 = vmatpush1.msra.mxu0 0.0
        %251 = vmatprep.subr.mxu0 0.0
        %252 = vmatpush1.msra.mxu0 0.0
        %253 = vmatprep.subr.mxu0 0.0
        %254 = vmatpush1.msra.mxu0 0.0
        %255 = vmatprep.subr.mxu0 0.0
        %256 = vmatpush1.msra.mxu0 0.0
        %257 = vmatprep.subr.mxu0 0.0
        %258 = vmatpush1.msra.mxu0 0.0
        %259 = vmatprep.subr.mxu0 0.0
        %260 = vmatpush1.msra.mxu0 0.0
        %261 = vmatprep.subr.mxu0 0.0
        %262 = vmatpush1.msra.mxu0 0.0
        %263 = vmatprep.subr.mxu0 0.0
        %264 = vmatpush1.msra.mxu0 0.0
        %265 = vmatprep.subr.mxu0 0.0
        %266 = vmatpush1.msra.mxu0 0.0
        %267 = vmatprep.subr.mxu0 0.0
        %268 = vmatpush1.msra.mxu0 0.0
        %269 = vmatprep.subr.mxu0 0.0
        %270 = vmatpush1.msra.mxu0 0.0
        %271 = vmatprep.subr.mxu0 0.0
        %272 = vmatpush1.msra.mxu0 0.0
        %273 = vmatprep.subr.mxu0 0.0
        %274 = vmatpush1.msra.mxu0 0.0
        %275 = vmatprep.subr.mxu0 0.0
        %276 = vmatpush1.msra.mxu0 0.0
        %277 = vmatprep.subr.mxu0 0.0
        %278 = vmatpush1.msra.mxu0 0.0
        %279 = vmatprep.subr.mxu0 0.0
        %280 = vmatpush1.msra.mxu0 0.0
        %281 = vmatprep.subr.mxu0 0.0
        %282 = vmatpush1.msra.mxu0 0.0
        %283 = vmatprep.subr.mxu0 0.0
        %284 = vmatpush1.msra.mxu0 0.0
        %285 = vmatprep.subr.mxu0 0.0
        %286 = vmatpush1.msra.mxu0 0.0
        %287 = vmatprep.subr.mxu0 0.0
        %288 = vmatpush1.msra.mxu0 0.0
        %289 = vmatprep.mubr.f32.mxu0 0.0
        %v290 = vand.u32 %v221, 4294901760
        %v291 = vsub.f32 %v221, %v290
        %v292 = vand.u32 %v291, 4294901760
        %v293 = vsub.f32 %v291, %v292
        %v294 = vand.u32 %v293, 4294901760
        %295 = vmatmul.mubr.f32.gmra.mrb[0].mxu0 %v294
        %v296 = vpop.f32.mrb[0].mxu0
        %v297 = vadd.f32 %v217, %v296
        %v298 = vpop.f32.mrb[0].mxu0
        %v299 = vadd.f32 %v217, %v298
        %300 = vdwg.mxu0
        %v301 = vand.u32 %v211, 4294901760
        %v302 = vsub.f32 %v211, %v301
        %v303 = vand.u32 %v302, 4294901760
        %v304 = vsub.f32 %v302, %v303
        %v305 = vand.u32 %v304, 4294901760
        %306 = vmatprep.subr.mxu0 %v305
        %v307 = vand.u32 %v210, 4294901760
        %v308 = vsub.f32 %v210, %v307
        %v309 = vand.u32 %v308, 4294901760
        %v310 = vsub.f32 %v308, %v309
        %v311 = vand.u32 %v310, 4294901760
        %312 = vmatpush1.msra.mxu0 %v311
        %313 = vmatprep.subr.mxu0 0.0
        %314 = vmatpush1.msra.mxu0 0.0
        %315 = vmatprep.subr.mxu0 0.0
        %316 = vmatpush1.msra.mxu0 0.0
        %317 = vmatprep.subr.mxu0 0.0
        %318 = vmatpush1.msra.mxu0 0.0
        %319 = vmatprep.subr.mxu0 0.0
        %320 = vmatpush1.msra.mxu0 0.0
        %321 = vmatprep.subr.mxu0 0.0
        %322 = vmatpush1.msra.mxu0 0.0
        %323 = vmatprep.subr.mxu0 0.0
        %324 = vmatpush1.msra.mxu0 0.0
        %325 = vmatprep.subr.mxu0 0.0
        %326 = vmatpush1.msra.mxu0 0.0
        %327 = vmatprep.subr.mxu0 0.0
        %328 = vmatpush1.msra.mxu0 0.0
        %329 = vmatprep.subr.mxu0 0.0
        %330 = vmatpush1.msra.mxu0 0.0
        %331 = vmatprep.subr.mxu0 0.0
        %332 = vmatpush1.msra.mxu0 0.0
        %333 = vmatprep.subr.mxu0 0.0
        %334 = vmatpush1.msra.mxu0 0.0
        %335 = vmatprep.subr.mxu0 0.0
        %336 = vmatpush1.msra.mxu0 0.0
        %337 = vmatprep.subr.mxu0 0.0
        %338 = vmatpush1.msra.mxu0 0.0
        %339 = vmatprep.subr.mxu0 0.0
        %340 = vmatpush1.msra.mxu0 0.0
        %341 = vmatprep.subr.mxu0 0.0
        %342 = vmatpush1.msra.mxu0 0.0
        %343 = vmatprep.subr.mxu0 0.0
        %344 = vmatpush1.msra.mxu0 0.0
        %345 = vmatprep.subr.mxu0 0.0
        %346 = vmatpush1.msra.mxu0 0.0
        %347 = vmatprep.subr.mxu0 0.0
        %348 = vmatpush1.msra.mxu0 0.0
        %349 = vmatprep.subr.mxu0 0.0
        %350 = vmatpush1.msra.mxu0 0.0
        %351 = vmatprep.subr.mxu0 0.0
        %352 = vmatpush1.msra.mxu0 0.0
        %353 = vmatprep.subr.mxu0 0.0
        %354 = vmatpush1.msra.mxu0 0.0
        %355 = vmatprep.subr.mxu0 0.0
        %356 = vmatpush1.msra.mxu0 0.0
        %357 = vmatprep.subr.mxu0 0.0
        %358 = vmatpush1.msra.mxu0 0.0
        %359 = vmatprep.subr.mxu0 0.0
        %360 = vmatpush1.msra.mxu0 0.0
        %361 = vmatprep.subr.mxu0 0.0
        %362 = vmatpush1.msra.mxu0 0.0
        %363 = vmatprep.subr.mxu0 0.0
        %364 = vmatpush1.msra.mxu0 0.0
        %365 = vmatprep.subr.mxu0 0.0
        %366 = vmatpush1.msra.mxu0 0.0
        %367 = vmatprep.subr.mxu0 0.0
        %368 = vmatpush1.msra.mxu0 0.0
        %369 = vmatprep.subr.mxu0 0.0
        %370 = vmatpush1.msra.mxu0 0.0
        %371 = vmatprep.subr.mxu0 0.0
        %372 = vmatpush1.msra.mxu0 0.0
        %373 = vmatprep.subr.mxu0 0.0
        %374 = vmatpush1.msra.mxu0 0.0
        %375 = vmatprep.mubr.f32.mxu0 0.0
        %v376 = vand.u32 %v221, 4294901760
        %377 = vmatmul.mubr.f32.gmra.mrb[0].mxu0 %v376
        %v378 = vpop.f32.mrb[0].mxu0
        %v379 = vadd.f32 %v297, %v378
        %v380 = vpop.f32.mrb[0].mxu0
        %v381 = vadd.f32 %v299, %v380
        %382 = vdwg.mxu0
        %v383 = vand.u32 %v211, 4294901760
        %v384 = vsub.f32 %v211, %v383
        %385 = vmatprep.subr.mxu0 %v384
        %v386 = vand.u32 %v210, 4294901760
        %v387 = vsub.f32 %v210, %v386
        %388 = vmatpush1.msra.mxu0 %v387
        %389 = vmatprep.subr.mxu0 0.0
        %390 = vmatpush1.msra.mxu0 0.0
        %391 = vmatprep.subr.mxu0 0.0
        %392 = vmatpush1.msra.mxu0 0.0
        %393 = vmatprep.subr.mxu0 0.0
        %394 = vmatpush1.msra.mxu0 0.0
        %395 = vmatprep.subr.mxu0 0.0
        %396 = vmatpush1.msra.mxu0 0.0
        %397 = vmatprep.subr.mxu0 0.0
        %398 = vmatpush1.msra.mxu0 0.0
        %399 = vmatprep.subr.mxu0 0.0
        %400 = vmatpush1.msra.mxu0 0.0
        %401 = vmatprep.subr.mxu0 0.0
        %402 = vmatpush1.msra.mxu0 0.0
        %403 = vmatprep.subr.mxu0 0.0
        %404 = vmatpush1.msra.mxu0 0.0
        %405 = vmatprep.subr.mxu0 0.0
        %406 = vmatpush1.msra.mxu0 0.0
        %407 = vmatprep.subr.mxu0 0.0
        %408 = vmatpush1.msra.mxu0 0.0
        %409 = vmatprep.subr.mxu0 0.0
        %410 = vmatpush1.msra.mxu0 0.0
        %411 = vmatprep.subr.mxu0 0.0
        %412 = vmatpush1.msra.mxu0 0.0
        %413 = vmatprep.subr.mxu0 0.0
        %414 = vmatpush1.msra.mxu0 0.0
        %415 = vmatprep.subr.mxu0 0.0
        %416 = vmatpush1.msra.mxu0 0.0
        %417 = vmatprep.subr.mxu0 0.0
        %418 = vmatpush1.msra.mxu0 0.0
        %419 = vmatprep.subr.mxu0 0.0
        %420 = vmatpush1.msra.mxu0 0.0
        %421 = vmatprep.subr.mxu0 0.0
        %422 = vmatpush1.msra.mxu0 0.0
        %423 = vmatprep.subr.mxu0 0.0
        %424 = vmatpush1.msra.mxu0 0.0
        %425 = vmatprep.subr.mxu0 0.0
        %426 = vmatpush1.msra.mxu0 0.0
        %427 = vmatprep.subr.mxu0 0.0
        %428 = vmatpush1.msra.mxu0 0.0
        %429 = vmatprep.subr.mxu0 0.0
        %430 = vmatpush1.msra.mxu0 0.0
        %431 = vmatprep.subr.mxu0 0.0
        %432 = vmatpush1.msra.mxu0 0.0
        %433 = vmatprep.subr.mxu0 0.0
        %434 = vmatpush1.msra.mxu0 0.0
        %435 = vmatprep.subr.mxu0 0.0
        %436 = vmatpush1.msra.mxu0 0.0
        %437 = vmatprep.subr.mxu0 0.0
        %438 = vmatpush1.msra.mxu0 0.0
        %439 = vmatprep.subr.mxu0 0.0
        %440 = vmatpush1.msra.mxu0 0.0
        %441 = vmatprep.subr.mxu0 0.0
        %442 = vmatpush1.msra.mxu0 0.0
        %443 = vmatprep.subr.mxu0 0.0
        %444 = vmatpush1.msra.mxu0 0.0
        %445 = vmatprep.subr.mxu0 0.0
        %446 = vmatpush1.msra.mxu0 0.0
        %447 = vmatprep.subr.mxu0 0.0
        %448 = vmatpush1.msra.mxu0 0.0
        %449 = vmatprep.subr.mxu0 0.0
        %450 = vmatpush1.msra.mxu0 0.0
        %451 = vmatprep.mubr.f32.mxu0 0.0
        %v452 = vand.u32 %v221, 4294901760
        %v453 = vsub.f32 %v221, %v452
        %454 = vmatmul.mubr.f32.gmra.mrb[0].mxu0 %v453
        %v455 = vpop.f32.mrb[0].mxu0
        %v456 = vadd.f32 %v379, %v455
        %v457 = vpop.f32.mrb[0].mxu0
        %v458 = vadd.f32 %v381, %v457
        %459 = vdwg.mxu0
        %v460 = vand.u32 %v211, 4294901760
        %461 = vmatprep.subr.mxu0 %v460
        %v462 = vand.u32 %v210, 4294901760
        %463 = vmatpush1.msra.mxu0 %v462
        %464 = vmatprep.subr.mxu0 0.0
        %465 = vmatpush1.msra.mxu0 0.0
        %466 = vmatprep.subr.mxu0 0.0
        %467 = vmatpush1.msra.mxu0 0.0
        %468 = vmatprep.subr.mxu0 0.0
        %469 = vmatpush1.msra.mxu0 0.0
        %470 = vmatprep.subr.mxu0 0.0
        %471 = vmatpush1.msra.mxu0 0.0
        %472 = vmatprep.subr.mxu0 0.0
        %473 = vmatpush1.msra.mxu0 0.0
        %474 = vmatprep.subr.mxu0 0.0
        %475 = vmatpush1.msra.mxu0 0.0
        %476 = vmatprep.subr.mxu0 0.0
        %477 = vmatpush1.msra.mxu0 0.0
        %478 = vmatprep.subr.mxu0 0.0
        %479 = vmatpush1.msra.mxu0 0.0
        %480 = vmatprep.subr.mxu0 0.0
        %481 = vmatpush1.msra.mxu0 0.0
        %482 = vmatprep.subr.mxu0 0.0
        %483 = vmatpush1.msra.mxu0 0.0
        %484 = vmatprep.subr.mxu0 0.0
        %485 = vmatpush1.msra.mxu0 0.0
        %486 = vmatprep.subr.mxu0 0.0
        %487 = vmatpush1.msra.mxu0 0.0
        %488 = vmatprep.subr.mxu0 0.0
        %489 = vmatpush1.msra.mxu0 0.0
        %490 = vmatprep.subr.mxu0 0.0
        %491 = vmatpush1.msra.mxu0 0.0
        %492 = vmatprep.subr.mxu0 0.0
        %493 = vmatpush1.msra.mxu0 0.0
        %494 = vmatprep.subr.mxu0 0.0
        %495 = vmatpush1.msra.mxu0 0.0
        %496 = vmatprep.subr.mxu0 0.0
        %497 = vmatpush1.msra.mxu0 0.0
        %498 = vmatprep.subr.mxu0 0.0
        %499 = vmatpush1.msra.mxu0 0.0
        %500 = vmatprep.subr.mxu0 0.0
        %501 = vmatpush1.msra.mxu0 0.0
        %502 = vmatprep.subr.mxu0 0.0
        %503 = vmatpush1.msra.mxu0 0.0
        %504 = vmatprep.subr.mxu0 0.0
        %505 = vmatpush1.msra.mxu0 0.0
        %506 = vmatprep.subr.mxu0 0.0
        %507 = vmatpush1.msra.mxu0 0.0
        %508 = vmatprep.subr.mxu0 0.0
        %509 = vmatpush1.msra.mxu0 0.0
        %510 = vmatprep.subr.mxu0 0.0
        %511 = vmatpush1.msra.mxu0 0.0
        %512 = vmatprep.subr.mxu0 0.0
        %513 = vmatpush1.msra.mxu0 0.0
        %514 = vmatprep.subr.mxu0 0.0
        %515 = vmatpush1.msra.mxu0 0.0
        %516 = vmatprep.subr.mxu0 0.0
        %517 = vmatpush1.msra.mxu0 0.0
        %518 = vmatprep.subr.mxu0 0.0
        %519 = vmatpush1.msra.mxu0 0.0
        %520 = vmatprep.subr.mxu0 0.0
        %521 = vmatpush1.msra.mxu0 0.0
        %522 = vmatprep.subr.mxu0 0.0
        %523 = vmatpush1.msra.mxu0 0.0
        %524 = vmatprep.subr.mxu0 0.0
        %525 = vmatpush1.msra.mxu0 0.0
        %526 = vmatprep.mubr.f32.mxu0 0.0
        %v527 = vand.u32 %v221, 4294901760
        %v528 = vsub.f32 %v221, %v527
        %v529 = vand.u32 %v528, 4294901760
        %530 = vmatmul.mubr.f32.gmra.mrb[0].mxu0 %v529
        %v531 = vpop.f32.mrb[0].mxu0
        %v532 = vadd.f32 %v456, %v531
        %v533 = vpop.f32.mrb[0].mxu0
        %v534 = vadd.f32 %v458, %v533
        %535 = vdwg.mxu0
        %v536 = vand.u32 %v211, 4294901760
        %v537 = vsub.f32 %v211, %v536
        %v538 = vand.u32 %v537, 4294901760
        %539 = vmatprep.subr.mxu0 %v538
        %v540 = vand.u32 %v210, 4294901760
        %v541 = vsub.f32 %v210, %v540
        %v542 = vand.u32 %v541, 4294901760
        %543 = vmatpush1.msra.mxu0 %v542
        %544 = vmatprep.subr.mxu0 0.0
        %545 = vmatpush1.msra.mxu0 0.0
        %546 = vmatprep.subr.mxu0 0.0
        %547 = vmatpush1.msra.mxu0 0.0
        %548 = vmatprep.subr.mxu0 0.0
        %549 = vmatpush1.msra.mxu0 0.0
        %550 = vmatprep.subr.mxu0 0.0
        %551 = vmatpush1.msra.mxu0 0.0
        %552 = vmatprep.subr.mxu0 0.0
        %553 = vmatpush1.msra.mxu0 0.0
        %554 = vmatprep.subr.mxu0 0.0
        %555 = vmatpush1.msra.mxu0 0.0
        %556 = vmatprep.subr.mxu0 0.0
        %557 = vmatpush1.msra.mxu0 0.0
        %558 = vmatprep.subr.mxu0 0.0
        %559 = vmatpush1.msra.mxu0 0.0
        %560 = vmatprep.subr.mxu0 0.0
        %561 = vmatpush1.msra.mxu0 0.0
        %562 = vmatprep.subr.mxu0 0.0
        %563 = vmatpush1.msra.mxu0 0.0
        %564 = vmatprep.subr.mxu0 0.0
        %565 = vmatpush1.msra.mxu0 0.0
        %566 = vmatprep.subr.mxu0 0.0
        %567 = vmatpush1.msra.mxu0 0.0
        %568 = vmatprep.subr.mxu0 0.0
        %569 = vmatpush1.msra.mxu0 0.0
        %570 = vmatprep.subr.mxu0 0.0
        %571 = vmatpush1.msra.mxu0 0.0
        %572 = vmatprep.subr.mxu0 0.0
        %573 = vmatpush1.msra.mxu0 0.0
        %574 = vmatprep.subr.mxu0 0.0
        %575 = vmatpush1.msra.mxu0 0.0
        %576 = vmatprep.subr.mxu0 0.0
        %577 = vmatpush1.msra.mxu0 0.0
        %578 = vmatprep.subr.mxu0 0.0
        %579 = vmatpush1.msra.mxu0 0.0
        %580 = vmatprep.subr.mxu0 0.0
        %581 = vmatpush1.msra.mxu0 0.0
        %582 = vmatprep.subr.mxu0 0.0
        %583 = vmatpush1.msra.mxu0 0.0
        %584 = vmatprep.subr.mxu0 0.0
        %585 = vmatpush1.msra.mxu0 0.0
        %586 = vmatprep.subr.mxu0 0.0
        %587 = vmatpush1.msra.mxu0 0.0
        %588 = vmatprep.subr.mxu0 0.0
        %589 = vmatpush1.msra.mxu0 0.0
        %590 = vmatprep.subr.mxu0 0.0
        %591 = vmatpush1.msra.mxu0 0.0
        %592 = vmatprep.subr.mxu0 0.0
        %593 = vmatpush1.msra.mxu0 0.0
        %594 = vmatprep.subr.mxu0 0.0
        %595 = vmatpush1.msra.mxu0 0.0
        %596 = vmatprep.subr.mxu0 0.0
        %597 = vmatpush1.msra.mxu0 0.0
        %598 = vmatprep.subr.mxu0 0.0
        %599 = vmatpush1.msra.mxu0 0.0
        %600 = vmatprep.subr.mxu0 0.0
        %601 = vmatpush1.msra.mxu0 0.0
        %602 = vmatprep.subr.mxu0 0.0
        %603 = vmatpush1.msra.mxu0 0.0
        %604 = vmatprep.subr.mxu0 0.0
        %605 = vmatpush1.msra.mxu0 0.0
        %606 = vmatprep.mubr.f32.mxu0 0.0
        %v607 = vand.u32 %v221, 4294901760
        %608 = vmatmul.mubr.f32.gmra.mrb[0].mxu0 %v607
        %v609 = vpop.f32.mrb[0].mxu0
        %v610 = vadd.f32 %v532, %v609
        %v611 = vpop.f32.mrb[0].mxu0
        %v612 = vadd.f32 %v534, %v611
        %613 = vdwg.mxu0
        %v614 = vand.u32 %v211, 4294901760
        %615 = vmatprep.subr.mxu0 %v614
        %v616 = vand.u32 %v210, 4294901760
        %617 = vmatpush1.msra.mxu0 %v616
        %618 = vmatprep.subr.mxu0 0.0
        %619 = vmatpush1.msra.mxu0 0.0
        %620 = vmatprep.subr.mxu0 0.0
        %621 = vmatpush1.msra.mxu0 0.0
        %622 = vmatprep.subr.mxu0 0.0
        %623 = vmatpush1.msra.mxu0 0.0
        %624 = vmatprep.subr.mxu0 0.0
        %625 = vmatpush1.msra.mxu0 0.0
        %626 = vmatprep.subr.mxu0 0.0
        %627 = vmatpush1.msra.mxu0 0.0
        %628 = vmatprep.subr.mxu0 0.0
        %629 = vmatpush1.msra.mxu0 0.0
        %630 = vmatprep.subr.mxu0 0.0
        %631 = vmatpush1.msra.mxu0 0.0
        %632 = vmatprep.subr.mxu0 0.0
        %633 = vmatpush1.msra.mxu0 0.0
        %634 = vmatprep.subr.mxu0 0.0
        %635 = vmatpush1.msra.mxu0 0.0
        %636 = vmatprep.subr.mxu0 0.0
        %637 = vmatpush1.msra.mxu0 0.0
        %638 = vmatprep.subr.mxu0 0.0
        %639 = vmatpush1.msra.mxu0 0.0
        %640 = vmatprep.subr.mxu0 0.0
        %641 = vmatpush1.msra.mxu0 0.0
        %642 = vmatprep.subr.mxu0 0.0
        %643 = vmatpush1.msra.mxu0 0.0
        %644 = vmatprep.subr.mxu0 0.0
        %645 = vmatpush1.msra.mxu0 0.0
        %646 = vmatprep.subr.mxu0 0.0
        %647 = vmatpush1.msra.mxu0 0.0
        %648 = vmatprep.subr.mxu0 0.0
        %649 = vmatpush1.msra.mxu0 0.0
        %650 = vmatprep.subr.mxu0 0.0
        %651 = vmatpush1.msra.mxu0 0.0
        %652 = vmatprep.subr.mxu0 0.0
        %653 = vmatpush1.msra.mxu0 0.0
        %654 = vmatprep.subr.mxu0 0.0
        %655 = vmatpush1.msra.mxu0 0.0
        %656 = vmatprep.subr.mxu0 0.0
        %657 = vmatpush1.msra.mxu0 0.0
        %658 = vmatprep.subr.mxu0 0.0
        %659 = vmatpush1.msra.mxu0 0.0
        %660 = vmatprep.subr.mxu0 0.0
        %661 = vmatpush1.msra.mxu0 0.0
        %662 = vmatprep.subr.mxu0 0.0
        %663 = vmatpush1.msra.mxu0 0.0
        %664 = vmatprep.subr.mxu0 0.0
        %665 = vmatpush1.msra.mxu0 0.0
        %666 = vmatprep.subr.mxu0 0.0
        %667 = vmatpush1.msra.mxu0 0.0
        %668 = vmatprep.subr.mxu0 0.0
        %669 = vmatpush1.msra.mxu0 0.0
        %670 = vmatprep.subr.mxu0 0.0
        %671 = vmatpush1.msra.mxu0 0.0
        %672 = vmatprep.subr.mxu0 0.0
        %673 = vmatpush1.msra.mxu0 0.0
        %674 = vmatprep.subr.mxu0 0.0
        %675 = vmatpush1.msra.mxu0 0.0
        %676 = vmatprep.subr.mxu0 0.0
        %677 = vmatpush1.msra.mxu0 0.0
        %678 = vmatprep.subr.mxu0 0.0
        %679 = vmatpush1.msra.mxu0 0.0
        %680 = vmatprep.mubr.f32.mxu0 0.0
        %v681 = vand.u32 %v221, 4294901760
        %682 = vmatmul.mubr.f32.gmra.mrb[0].mxu0 %v681
        %v683 = vpop.f32.mrb[0].mxu0
        %v684 = vadd.f32 %v610, %v683
        %v685 = vpop.f32.mrb[0].mxu0
        %v686 = vadd.f32 %v612, %v685
        %687 = vdwg.mxu0
        %v688 = vld [vmem:[#allocation2] sm:$0xff]
        %v689 = vand.u32 %v686, 4294901760
        %690 = vmatprep.subr.mxu0 %v689
        %v691 = vand.u32 %v684, 4294901760
        %692 = vmatpush1.xpose.msra.mxu0 %v691
        %693 = vmatprep.subr.mxu0 0.0
        %694 = vmatpush1.xpose.msra.mxu0 0.0
        %695 = vmatprep.subr.mxu0 0.0
        %696 = vmatpush1.xpose.msra.mxu0 0.0
        %697 = vmatprep.subr.mxu0 0.0
        %698 = vmatpush1.xpose.msra.mxu0 0.0
        %699 = vmatprep.subr.mxu0 0.0
        %700 = vmatpush1.xpose.msra.mxu0 0.0
        %701 = vmatprep.subr.mxu0 0.0
        %702 = vmatpush1.xpose.msra.mxu0 0.0
        %703 = vmatprep.subr.mxu0 0.0
        %704 = vmatpush1.xpose.msra.mxu0 0.0
        %705 = vmatprep.subr.mxu0 0.0
        %706 = vmatpush1.xpose.msra.mxu0 0.0
        %707 = vmatprep.subr.mxu0 0.0
        %708 = vmatpush1.xpose.msra.mxu0 0.0
        %709 = vmatprep.subr.mxu0 0.0
        %710 = vmatpush1.xpose.msra.mxu0 0.0
        %711 = vmatprep.subr.mxu0 0.0
        %712 = vmatpush1.xpose.msra.mxu0 0.0
        %713 = vmatprep.subr.mxu0 0.0
        %714 = vmatpush1.xpose.msra.mxu0 0.0
        %715 = vmatprep.subr.mxu0 0.0
        %716 = vmatpush1.xpose.msra.mxu0 0.0
        %717 = vmatprep.subr.mxu0 0.0
        %718 = vmatpush1.xpose.msra.mxu0 0.0
        %719 = vmatprep.subr.mxu0 0.0
        %720 = vmatpush1.xpose.msra.mxu0 0.0
        %721 = vmatprep.subr.mxu0 0.0
        %722 = vmatpush1.xpose.msra.mxu0 0.0
        %723 = vmatprep.subr.mxu0 0.0
        %724 = vmatpush1.xpose.msra.mxu0 0.0
        %725 = vmatprep.subr.mxu0 0.0
        %726 = vmatpush1.xpose.msra.mxu0 0.0
        %727 = vmatprep.subr.mxu0 0.0
        %728 = vmatpush1.xpose.msra.mxu0 0.0
        %729 = vmatprep.subr.mxu0 0.0
        %730 = vmatpush1.xpose.msra.mxu0 0.0
        %731 = vmatprep.subr.mxu0 0.0
        %732 = vmatpush1.xpose.msra.mxu0 0.0
        %733 = vmatprep.subr.mxu0 0.0
        %734 = vmatpush1.xpose.msra.mxu0 0.0
        %735 = vmatprep.subr.mxu0 0.0
        %736 = vmatpush1.xpose.msra.mxu0 0.0
        %737 = vmatprep.subr.mxu0 0.0
        %738 = vmatpush1.xpose.msra.mxu0 0.0
        %739 = vmatprep.subr.mxu0 0.0
        %740 = vmatpush1.xpose.msra.mxu0 0.0
        %741 = vmatprep.subr.mxu0 0.0
        %742 = vmatpush1.xpose.msra.mxu0 0.0
        %743 = vmatprep.subr.mxu0 0.0
        %744 = vmatpush1.xpose.msra.mxu0 0.0
        %745 = vmatprep.subr.mxu0 0.0
        %746 = vmatpush1.xpose.msra.mxu0 0.0
        %747 = vmatprep.subr.mxu0 0.0
        %748 = vmatpush1.xpose.msra.mxu0 0.0
        %749 = vmatprep.subr.mxu0 0.0
        %750 = vmatpush1.xpose.msra.mxu0 0.0
        %751 = vmatprep.subr.mxu0 0.0
        %752 = vmatpush1.xpose.msra.mxu0 0.0
        %753 = vmatprep.subr.mxu0 0.0
        %754 = vmatpush1.xpose.msra.mxu0 0.0
        %v755 = vand.u32 %v686, 4294901760
        %v756 = vsub.f32 %v686, %v755
        %v757 = vand.u32 %v756, 4294901760
        %v758 = vsub.f32 %v756, %v757
        %v759 = vand.u32 %v758, 4294901760
        %760 = vmatprep.mubr.f32.mxu0 %v759
        %v761 = vand.u32 %v684, 4294901760
        %v762 = vsub.f32 %v684, %v761
        %v763 = vand.u32 %v762, 4294901760
        %v764 = vsub.f32 %v762, %v763
        %v765 = vand.u32 %v764, 4294901760
        %766 = vmatmul.mubr.f32.gmra.mrb[0].mxu0 %v765
        %v767 = vpop.f32.mrb[0].mxu0
        %v768 = vadd.f32 0.0, %v767
        %v769 = vpop.f32.mrb[0].mxu0
        %770 = vdwg.mxu0
        %v771 = vand.u32 %v686, 4294901760
        %v772 = vsub.f32 %v686, %v771
        %v773 = vand.u32 %v772, 4294901760
        %v774 = vsub.f32 %v772, %v773
        %v775 = vand.u32 %v774, 4294901760
        %776 = vmatprep.subr.mxu0 %v775
        %v777 = vand.u32 %v684, 4294901760
        %v778 = vsub.f32 %v684, %v777
        %v779 = vand.u32 %v778, 4294901760
        %v780 = vsub.f32 %v778, %v779
        %v781 = vand.u32 %v780, 4294901760
        %782 = vmatpush1.xpose.msra.mxu0 %v781
        %783 = vmatprep.subr.mxu0 0.0
        %784 = vmatpush1.xpose.msra.mxu0 0.0
        %785 = vmatprep.subr.mxu0 0.0
        %786 = vmatpush1.xpose.msra.mxu0 0.0
        %787 = vmatprep.subr.mxu0 0.0
        %788 = vmatpush1.xpose.msra.mxu0 0.0
        %789 = vmatprep.subr.mxu0 0.0
        %790 = vmatpush1.xpose.msra.mxu0 0.0
        %791 = vmatprep.subr.mxu0 0.0
        %792 = vmatpush1.xpose.msra.mxu0 0.0
        %793 = vmatprep.subr.mxu0 0.0
        %794 = vmatpush1.xpose.msra.mxu0 0.0
        %795 = vmatprep.subr.mxu0 0.0
        %796 = vmatpush1.xpose.msra.mxu0 0.0
        %797 = vmatprep.subr.mxu0 0.0
        %798 = vmatpush1.xpose.msra.mxu0 0.0
        %799 = vmatprep.subr.mxu0 0.0
        %800 = vmatpush1.xpose.msra.mxu0 0.0
        %801 = vmatprep.subr.mxu0 0.0
        %802 = vmatpush1.xpose.msra.mxu0 0.0
        %803 = vmatprep.subr.mxu0 0.0
        %804 = vmatpush1.xpose.msra.mxu0 0.0
        %805 = vmatprep.subr.mxu0 0.0
        %806 = vmatpush1.xpose.msra.mxu0 0.0
        %807 = vmatprep.subr.mxu0 0.0
        %808 = vmatpush1.xpose.msra.mxu0 0.0
        %809 = vmatprep.subr.mxu0 0.0
        %810 = vmatpush1.xpose.msra.mxu0 0.0
        %811 = vmatprep.subr.mxu0 0.0
        %812 = vmatpush1.xpose.msra.mxu0 0.0
        %813 = vmatprep.subr.mxu0 0.0
        %814 = vmatpush1.xpose.msra.mxu0 0.0
        %815 = vmatprep.subr.mxu0 0.0
        %816 = vmatpush1.xpose.msra.mxu0 0.0
        %817 = vmatprep.subr.mxu0 0.0
        %818 = vmatpush1.xpose.msra.mxu0 0.0
        %819 = vmatprep.subr.mxu0 0.0
        %820 = vmatpush1.xpose.msra.mxu0 0.0
        %821 = vmatprep.subr.mxu0 0.0
        %822 = vmatpush1.xpose.msra.mxu0 0.0
        %823 = vmatprep.subr.mxu0 0.0
        %824 = vmatpush1.xpose.msra.mxu0 0.0
        %825 = vmatprep.subr.mxu0 0.0
        %826 = vmatpush1.xpose.msra.mxu0 0.0
        %827 = vmatprep.subr.mxu0 0.0
        %828 = vmatpush1.xpose.msra.mxu0 0.0
        %829 = vmatprep.subr.mxu0 0.0
        %830 = vmatpush1.xpose.msra.mxu0 0.0
        %831 = vmatprep.subr.mxu0 0.0
        %832 = vmatpush1.xpose.msra.mxu0 0.0
        %833 = vmatprep.subr.mxu0 0.0
        %834 = vmatpush1.xpose.msra.mxu0 0.0
        %835 = vmatprep.subr.mxu0 0.0
        %836 = vmatpush1.xpose.msra.mxu0 0.0
        %837 = vmatprep.subr.mxu0 0.0
        %838 = vmatpush1.xpose.msra.mxu0 0.0
        %839 = vmatprep.subr.mxu0 0.0
        %840 = vmatpush1.xpose.msra.mxu0 0.0
        %841 = vmatprep.subr.mxu0 0.0
        %842 = vmatpush1.xpose.msra.mxu0 0.0
        %843 = vmatprep.subr.mxu0 0.0
        %844 = vmatpush1.xpose.msra.mxu0 0.0
        %v845 = vand.u32 %v686, 4294901760
        %846 = vmatprep.mubr.f32.mxu0 %v845
        %v847 = vand.u32 %v684, 4294901760
        %848 = vmatmul.mubr.f32.gmra.mrb[0].mxu0 %v847
        %v849 = vpop.f32.mrb[0].mxu0
        %v850 = vadd.f32 %v768, %v849
        %v851 = vpop.f32.mrb[0].mxu0
        %852 = vdwg.mxu0
        %v853 = vand.u32 %v686, 4294901760
        %v854 = vsub.f32 %v686, %v853
        %855 = vmatprep.subr.mxu0 %v854
        %v856 = vand.u32 %v684, 4294901760
        %v857 = vsub.f32 %v684, %v856
        %858 = vmatpush1.xpose.msra.mxu0 %v857
        %859 = vmatprep.subr.mxu0 0.0
        %860 = vmatpush1.xpose.msra.mxu0 0.0
        %861 = vmatprep.subr.mxu0 0.0
        %862 = vmatpush1.xpose.msra.mxu0 0.0
        %863 = vmatprep.subr.mxu0 0.0
        %864 = vmatpush1.xpose.msra.mxu0 0.0
        %865 = vmatprep.subr.mxu0 0.0
        %866 = vmatpush1.xpose.msra.mxu0 0.0
        %867 = vmatprep.subr.mxu0 0.0
        %868 = vmatpush1.xpose.msra.mxu0 0.0
        %869 = vmatprep.subr.mxu0 0.0
        %870 = vmatpush1.xpose.msra.mxu0 0.0
        %871 = vmatprep.subr.mxu0 0.0
        %872 = vmatpush1.xpose.msra.mxu0 0.0
        %873 = vmatprep.subr.mxu0 0.0
        %874 = vmatpush1.xpose.msra.mxu0 0.0
        %875 = vmatprep.subr.mxu0 0.0
        %876 = vmatpush1.xpose.msra.mxu0 0.0
        %877 = vmatprep.subr.mxu0 0.0
        %878 = vmatpush1.xpose.msra.mxu0 0.0
        %879 = vmatprep.subr.mxu0 0.0
        %880 = vmatpush1.xpose.msra.mxu0 0.0
        %881 = vmatprep.subr.mxu0 0.0
        %882 = vmatpush1.xpose.msra.mxu0 0.0
        %883 = vmatprep.subr.mxu0 0.0
        %884 = vmatpush1.xpose.msra.mxu0 0.0
        %885 = vmatprep.subr.mxu0 0.0
        %886 = vmatpush1.xpose.msra.mxu0 0.0
        %887 = vmatprep.subr.mxu0 0.0
        %888 = vmatpush1.xpose.msra.mxu0 0.0
        %889 = vmatprep.subr.mxu0 0.0
        %890 = vmatpush1.xpose.msra.mxu0 0.0
        %891 = vmatprep.subr.mxu0 0.0
        %892 = vmatpush1.xpose.msra.mxu0 0.0
        %893 = vmatprep.subr.mxu0 0.0
        %894 = vmatpush1.xpose.msra.mxu0 0.0
        %895 = vmatprep.subr.mxu0 0.0
        %896 = vmatpush1.xpose.msra.mxu0 0.0
        %897 = vmatprep.subr.mxu0 0.0
        %898 = vmatpush1.xpose.msra.mxu0 0.0
        %899 = vmatprep.subr.mxu0 0.0
        %900 = vmatpush1.xpose.msra.mxu0 0.0
        %901 = vmatprep.subr.mxu0 0.0
        %902 = vmatpush1.xpose.msra.mxu0 0.0
        %903 = vmatprep.subr.mxu0 0.0
        %904 = vmatpush1.xpose.msra.mxu0 0.0
        %905 = vmatprep.subr.mxu0 0.0
        %906 = vmatpush1.xpose.msra.mxu0 0.0
        %907 = vmatprep.subr.mxu0 0.0
        %908 = vmatpush1.xpose.msra.mxu0 0.0
        %909 = vmatprep.subr.mxu0 0.0
        %910 = vmatpush1.xpose.msra.mxu0 0.0
        %911 = vmatprep.subr.mxu0 0.0
        %912 = vmatpush1.xpose.msra.mxu0 0.0
        %913 = vmatprep.subr.mxu0 0.0
        %914 = vmatpush1.xpose.msra.mxu0 0.0
        %915 = vmatprep.subr.mxu0 0.0
        %916 = vmatpush1.xpose.msra.mxu0 0.0
        %917 = vmatprep.subr.mxu0 0.0
        %918 = vmatpush1.xpose.msra.mxu0 0.0
        %919 = vmatprep.subr.mxu0 0.0
        %920 = vmatpush1.xpose.msra.mxu0 0.0
        %v921 = vand.u32 %v686, 4294901760
        %v922 = vsub.f32 %v686, %v921
        %923 = vmatprep.mubr.f32.mxu0 %v922
        %v924 = vand.u32 %v684, 4294901760
        %v925 = vsub.f32 %v684, %v924
        %926 = vmatmul.mubr.f32.gmra.mrb[0].mxu0 %v925
        %v927 = vpop.f32.mrb[0].mxu0
        %v928 = vadd.f32 %v850, %v927
        %v929 = vpop.f32.mrb[0].mxu0
        %930 = vdwg.mxu0
        %v931 = vand.u32 %v686, 4294901760
        %932 = vmatprep.subr.mxu0 %v931
        %v933 = vand.u32 %v684, 4294901760
        %934 = vmatpush1.xpose.msra.mxu0 %v933
        %935 = vmatprep.subr.mxu0 0.0
        %936 = vmatpush1.xpose.msra.mxu0 0.0
        %937 = vmatprep.subr.mxu0 0.0
        %938 = vmatpush1.xpose.msra.mxu0 0.0
        %939 = vmatprep.subr.mxu0 0.0
        %940 = vmatpush1.xpose.msra.mxu0 0.0
        %941 = vmatprep.subr.mxu0 0.0
        %942 = vmatpush1.xpose.msra.mxu0 0.0
        %943 = vmatprep.subr.mxu0 0.0
        %944 = vmatpush1.xpose.msra.mxu0 0.0
        %945 = vmatprep.subr.mxu0 0.0
        %946 = vmatpush1.xpose.msra.mxu0 0.0
        %947 = vmatprep.subr.mxu0 0.0
        %948 = vmatpush1.xpose.msra.mxu0 0.0
        %949 = vmatprep.subr.mxu0 0.0
        %950 = vmatpush1.xpose.msra.mxu0 0.0
        %951 = vmatprep.subr.mxu0 0.0
        %952 = vmatpush1.xpose.msra.mxu0 0.0
        %953 = vmatprep.subr.mxu0 0.0
        %954 = vmatpush1.xpose.msra.mxu0 0.0
        %955 = vmatprep.subr.mxu0 0.0
        %956 = vmatpush1.xpose.msra.mxu0 0.0
        %957 = vmatprep.subr.mxu0 0.0
        %958 = vmatpush1.xpose.msra.mxu0 0.0
        %959 = vmatprep.subr.mxu0 0.0
        %960 = vmatpush1.xpose.msra.mxu0 0.0
        %961 = vmatprep.subr.mxu0 0.0
        %962 = vmatpush1.xpose.msra.mxu0 0.0
        %963 = vmatprep.subr.mxu0 0.0
        %964 = vmatpush1.xpose.msra.mxu0 0.0
        %965 = vmatprep.subr.mxu0 0.0
        %966 = vmatpush1.xpose.msra.mxu0 0.0
        %967 = vmatprep.subr.mxu0 0.0
        %968 = vmatpush1.xpose.msra.mxu0 0.0
        %969 = vmatprep.subr.mxu0 0.0
        %970 = vmatpush1.xpose.msra.mxu0 0.0
        %971 = vmatprep.subr.mxu0 0.0
        %972 = vmatpush1.xpose.msra.mxu0 0.0
        %973 = vmatprep.subr.mxu0 0.0
        %974 = vmatpush1.xpose.msra.mxu0 0.0
        %975 = vmatprep.subr.mxu0 0.0
        %976 = vmatpush1.xpose.msra.mxu0 0.0
        %977 = vmatprep.subr.mxu0 0.0
        %978 = vmatpush1.xpose.msra.mxu0 0.0
        %979 = vmatprep.subr.mxu0 0.0
        %980 = vmatpush1.xpose.msra.mxu0 0.0
        %981 = vmatprep.subr.mxu0 0.0
        %982 = vmatpush1.xpose.msra.mxu0 0.0
        %983 = vmatprep.subr.mxu0 0.0
        %984 = vmatpush1.xpose.msra.mxu0 0.0
        %985 = vmatprep.subr.mxu0 0.0
        %986 = vmatpush1.xpose.msra.mxu0 0.0
        %987 = vmatprep.subr.mxu0 0.0
        %988 = vmatpush1.xpose.msra.mxu0 0.0
        %989 = vmatprep.subr.mxu0 0.0
        %990 = vmatpush1.xpose.msra.mxu0 0.0
        %991 = vmatprep.subr.mxu0 0.0
        %992 = vmatpush1.xpose.msra.mxu0 0.0
        %993 = vmatprep.subr.mxu0 0.0
        %994 = vmatpush1.xpose.msra.mxu0 0.0
        %995 = vmatprep.subr.mxu0 0.0
        %996 = vmatpush1.xpose.msra.mxu0 0.0
        %v997 = vand.u32 %v686, 4294901760
        %v998 = vsub.f32 %v686, %v997
        %v999 = vand.u32 %v998, 4294901760
        %1000 = vmatprep.mubr.f32.mxu0 %v999
        %v1001 = vand.u32 %v684, 4294901760
        %v1002 = vsub.f32 %v684, %v1001
        %v1003 = vand.u32 %v1002, 4294901760
        %1004 = vmatmul.mubr.f32.gmra.mrb[0].mxu0 %v1003
        %v1005 = vpop.f32.mrb[0].mxu0
        %v1006 = vadd.f32 %v928, %v1005
        %v1007 = vpop.f32.mrb[0].mxu0
        %1008 = vdwg.mxu0
        %v1009 = vand.u32 %v686, 4294901760
        %v1010 = vsub.f32 %v686, %v1009
        %v1011 = vand.u32 %v1010, 4294901760
        %1012 = vmatprep.subr.mxu0 %v1011
        %v1013 = vand.u32 %v684, 4294901760
        %v1014 = vsub.f32 %v684, %v1013
        %v1015 = vand.u32 %v1014, 4294901760
        %1016 = vmatpush1.xpose.msra.mxu0 %v1015
        %1017 = vmatprep.subr.mxu0 0.0
        %1018 = vmatpush1.xpose.msra.mxu0 0.0
        %1019 = vmatprep.subr.mxu0 0.0
        %1020 = vmatpush1.xpose.msra.mxu0 0.0
        %1021 = vmatprep.subr.mxu0 0.0
        %1022 = vmatpush1.xpose.msra.mxu0 0.0
        %1023 = vmatprep.subr.mxu0 0.0
        %1024 = vmatpush1.xpose.msra.mxu0 0.0
        %1025 = vmatprep.subr.mxu0 0.0
        %1026 = vmatpush1.xpose.msra.mxu0 0.0
        %1027 = vmatprep.subr.mxu0 0.0
        %1028 = vmatpush1.xpose.msra.mxu0 0.0
        %1029 = vmatprep.subr.mxu0 0.0
        %1030 = vmatpush1.xpose.msra.mxu0 0.0
        %1031 = vmatprep.subr.mxu0 0.0
        %1032 = vmatpush1.xpose.msra.mxu0 0.0
        %1033 = vmatprep.subr.mxu0 0.0
        %1034 = vmatpush1.xpose.msra.mxu0 0.0
        %1035 = vmatprep.subr.mxu0 0.0
        %1036 = vmatpush1.xpose.msra.mxu0 0.0
        %1037 = vmatprep.subr.mxu0 0.0
        %1038 = vmatpush1.xpose.msra.mxu0 0.0
        %1039 = vmatprep.subr.mxu0 0.0
        %1040 = vmatpush1.xpose.msra.mxu0 0.0
        %1041 = vmatprep.subr.mxu0 0.0
        %1042 = vmatpush1.xpose.msra.mxu0 0.0
        %1043 = vmatprep.subr.mxu0 0.0
        %1044 = vmatpush1.xpose.msra.mxu0 0.0
        %1045 = vmatprep.subr.mxu0 0.0
        %1046 = vmatpush1.xpose.msra.mxu0 0.0
        %1047 = vmatprep.subr.mxu0 0.0
        %1048 = vmatpush1.xpose.msra.mxu0 0.0
        %1049 = vmatprep.subr.mxu0 0.0
        %1050 = vmatpush1.xpose.msra.mxu0 0.0
        %1051 = vmatprep.subr.mxu0 0.0
        %1052 = vmatpush1.xpose.msra.mxu0 0.0
        %1053 = vmatprep.subr.mxu0 0.0
        %1054 = vmatpush1.xpose.msra.mxu0 0.0
        %1055 = vmatprep.subr.mxu0 0.0
        %1056 = vmatpush1.xpose.msra.mxu0 0.0
        %1057 = vmatprep.subr.mxu0 0.0
        %1058 = vmatpush1.xpose.msra.mxu0 0.0
        %1059 = vmatprep.subr.mxu0 0.0
        %1060 = vmatpush1.xpose.msra.mxu0 0.0
        %1061 = vmatprep.subr.mxu0 0.0
        %1062 = vmatpush1.xpose.msra.mxu0 0.0
        %1063 = vmatprep.subr.mxu0 0.0
        %1064 = vmatpush1.xpose.msra.mxu0 0.0
        %1065 = vmatprep.subr.mxu0 0.0
        %1066 = vmatpush1.xpose.msra.mxu0 0.0
        %1067 = vmatprep.subr.mxu0 0.0
        %1068 = vmatpush1.xpose.msra.mxu0 0.0
        %1069 = vmatprep.subr.mxu0 0.0
        %1070 = vmatpush1.xpose.msra.mxu0 0.0
        %1071 = vmatprep.subr.mxu0 0.0
        %1072 = vmatpush1.xpose.msra.mxu0 0.0
        %1073 = vmatprep.subr.mxu0 0.0
        %1074 = vmatpush1.xpose.msra.mxu0 0.0
        %1075 = vmatprep.subr.mxu0 0.0
        %1076 = vmatpush1.xpose.msra.mxu0 0.0
        %1077 = vmatprep.subr.mxu0 0.0
        %1078 = vmatpush1.xpose.msra.mxu0 0.0
        %v1079 = vand.u32 %v686, 4294901760
        %1080 = vmatprep.mubr.f32.mxu0 %v1079
        %v1081 = vand.u32 %v684, 4294901760
        %1082 = vmatmul.mubr.f32.gmra.mrb[0].mxu0 %v1081
        %v1083 = vpop.f32.mrb[0].mxu0
        %v1084 = vadd.f32 %v1006, %v1083
        %v1085 = vpop.f32.mrb[0].mxu0
        %1086 = vdwg.mxu0
        %v1087 = vand.u32 %v686, 4294901760
        %1088 = vmatprep.subr.mxu0 %v1087
        %v1089 = vand.u32 %v684, 4294901760
        %1090 = vmatpush1.xpose.msra.mxu0 %v1089
        %1091 = vmatprep.subr.mxu0 0.0
        %1092 = vmatpush1.xpose.msra.mxu0 0.0
        %1093 = vmatprep.subr.mxu0 0.0
        %1094 = vmatpush1.xpose.msra.mxu0 0.0
        %1095 = vmatprep.subr.mxu0 0.0
        %1096 = vmatpush1.xpose.msra.mxu0 0.0
        %1097 = vmatprep.subr.mxu0 0.0
        %1098 = vmatpush1.xpose.msra.mxu0 0.0
        %1099 = vmatprep.subr.mxu0 0.0
        %1100 = vmatpush1.xpose.msra.mxu0 0.0
        %1101 = vmatprep.subr.mxu0 0.0
        %1102 = vmatpush1.xpose.msra.mxu0 0.0
        %1103 = vmatprep.subr.mxu0 0.0
        %1104 = vmatpush1.xpose.msra.mxu0 0.0
        %1105 = vmatprep.subr.mxu0 0.0
        %1106 = vmatpush1.xpose.msra.mxu0 0.0
        %1107 = vmatprep.subr.mxu0 0.0
        %1108 = vmatpush1.xpose.msra.mxu0 0.0
        %1109 = vmatprep.subr.mxu0 0.0
        %1110 = vmatpush1.xpose.msra.mxu0 0.0
        %1111 = vmatprep.subr.mxu0 0.0
        %1112 = vmatpush1.xpose.msra.mxu0 0.0
        %1113 = vmatprep.subr.mxu0 0.0
        %1114 = vmatpush1.xpose.msra.mxu0 0.0
        %1115 = vmatprep.subr.mxu0 0.0
        %1116 = vmatpush1.xpose.msra.mxu0 0.0
        %1117 = vmatprep.subr.mxu0 0.0
        %1118 = vmatpush1.xpose.msra.mxu0 0.0
        %1119 = vmatprep.subr.mxu0 0.0
        %1120 = vmatpush1.xpose.msra.mxu0 0.0
        %1121 = vmatprep.subr.mxu0 0.0
        %1122 = vmatpush1.xpose.msra.mxu0 0.0
        %1123 = vmatprep.subr.mxu0 0.0
        %1124 = vmatpush1.xpose.msra.mxu0 0.0
        %1125 = vmatprep.subr.mxu0 0.0
        %1126 = vmatpush1.xpose.msra.mxu0 0.0
        %1127 = vmatprep.subr.mxu0 0.0
        %1128 = vmatpush1.xpose.msra.mxu0 0.0
        %1129 = vmatprep.subr.mxu0 0.0
        %1130 = vmatpush1.xpose.msra.mxu0 0.0
        %1131 = vmatprep.subr.mxu0 0.0
        %1132 = vmatpush1.xpose.msra.mxu0 0.0
        %1133 = vmatprep.subr.mxu0 0.0
        %1134 = vmatpush1.xpose.msra.mxu0 0.0
        %1135 = vmatprep.subr.mxu0 0.0
        %1136 = vmatpush1.xpose.msra.mxu0 0.0
        %1137 = vmatprep.subr.mxu0 0.0
        %1138 = vmatpush1.xpose.msra.mxu0 0.0
        %1139 = vmatprep.subr.mxu0 0.0
        %1140 = vmatpush1.xpose.msra.mxu0 0.0
        %1141 = vmatprep.subr.mxu0 0.0
        %1142 = vmatpush1.xpose.msra.mxu0 0.0
        %1143 = vmatprep.subr.mxu0 0.0
        %1144 = vmatpush1.xpose.msra.mxu0 0.0
        %1145 = vmatprep.subr.mxu0 0.0
        %1146 = vmatpush1.xpose.msra.mxu0 0.0
        %1147 = vmatprep.subr.mxu0 0.0
        %1148 = vmatpush1.xpose.msra.mxu0 0.0
        %1149 = vmatprep.subr.mxu0 0.0
        %1150 = vmatpush1.xpose.msra.mxu0 0.0
        %1151 = vmatprep.subr.mxu0 0.0
        %1152 = vmatpush1.xpose.msra.mxu0 0.0
        %v1153 = vand.u32 %v686, 4294901760
        %1154 = vmatprep.mubr.f32.mxu0 %v1153
        %v1155 = vand.u32 %v684, 4294901760
        %1156 = vmatmul.mubr.f32.gmra.mrb[0].mxu0 %v1155
        %v1157 = vpop.f32.mrb[0].mxu0
        %v1158 = vadd.f32 %v1084, %v1157
        %v1159 = vpop.f32.mrb[0].mxu0
        %1160 = vdwg.mxu0
        %v1161 = vadd.f32 %v688, %v1158
        %1162 = vst.msk [vmem:[#allocation2] sm:$0xff] %vm219, %v1161
        // Predicated region
        $region41: #{tpu_custom_call.1} parent=31 // pred_check
          %p1163 = pneg %p204
        $region42: #{tpu_custom_call.1} parent=31 // pred_check_branch
          %1165 = sbr.rel (%p1163) target = $region44
        $region43: #{tpu_custom_call.1} parent=31 // pred_region
          %v1166 = vld [vmem:[#allocation2] sm:$0xff]
          %v1167 = vlaneseq
          %v1168 = vand.u32 %v1167, 127
          %vm1169 = vcmp.lt.s32.totalorder %v1168, 4
          %v1170 = vsel %vm1169, %v1166, -1e+30
          %v1171 = vsel %vm219, %v1170, -inf
          %1172 = vmax.xlane.f32.xlu0 %v1171
          %v1173 = vpop.xlane.xlu0 %1172
          %v1174 = vsub.f32 %v1170, %v1173
          %v1175 = vmul.f32 %v1174, 1.442695
          %v1176 = vpow.pop %v1175
          %v1177 = vsel %vm219, %v1176, 0.0
          %1178 = vadd.xlane.f32.xlu0 %v1177
          %v1179 = vpop.xlane.xlu0 %1178
          %v1180 = vrcp.pop %v1179
          %v1181 = vmul.f32 %v1176, %v1180
          %1182 = vst.msk [vmem:[%s202] sm:$0xff] %vm219, %v1181
        $region44: #{tpu_custom_call.1} parent=31 // pred_fallthru
          _
        %s1183 = sand.u32 %s110, 1
        %s1184 = scalar_lea.sflag [#allocation5], %s1183
        %s1185 = sand.u32 %s110, 1
        %s1186 = smul.addr %s1185, 8
        %s1187 = scalar_lea.vmem [#allocation6], %s1186
        // Predicated region
        $region45: #{tpu_custom_call.1} parent=31 // pred_check
          %p1188 = pneg %p120
        $region46: #{tpu_custom_call.1} parent=31 // pred_check_branch
          %1190 = sbr.rel (%p1188) target = $region48
        $region47: #{tpu_custom_call.1} parent=31 // pred_region
          %s1192 = ssub.s32 128, 128
          %1193 = vsyncadd %s1184, %s1192
          %s1194 = smul.addr %s24, 128
          %s1195 = scalar_lea.hbm %s3, %s1194
          %s1197 = sshll.u32 %s1187, 4
          %s1198 = int_to_ptr.vmem [resolvable:$true] %s1197
          %1200 = dma.vmem_to_hbm [thread:$0]  %s1198, 128, %s1195, %s1184
        $region48: #{tpu_custom_call.1} parent=31 // pred_fallthru
          _
      $region32: #{tpu_custom_call.1} parent=5 // pred_fallthru
        _
      %p1201 = scmp.le.s32.totalorder 2, %s15
      // Predicated region
      $region49: #{tpu_custom_call.1} parent=5 // pred_check
        %p1202 = pneg %p1201
      $region50: #{tpu_custom_call.1} parent=5 // pred_check_branch
        %1204 = sbr.rel (%p1202) target = $region52
      $region51: #{tpu_custom_call.1} parent=5 // pred_region
        %s1205 = ssub.s32 %s15, 2
        // Predicated region
        $region53: #{tpu_custom_call.1} parent=51 // pred_check
          %p1206 = pneg %p126
        $region54: #{tpu_custom_call.1} parent=51 // pred_check_branch
          %1208 = sbr.rel (%p1206) target = $region56
        $region55: #{tpu_custom_call.1} parent=51 // pred_region
          %s1209 = sand.u32 %s111, 1
          %s1210 = scalar_lea.sflag [#allocation5], %s1209
          %s1211 = sand.u32 %s111, 1
          %s1212 = smul.addr %s1211, 8
          %s1213 = scalar_lea.vmem [#allocation6], %s1212
          %1214 = dma.done %s1210, 128
        $region56: #{tpu_custom_call.1} parent=51 // pred_fallthru
          _
      $region52: #{tpu_custom_call.1} parent=5 // pred_fallthru
        _
    $region6: #{tpu_custom_call.1} parent=1 // loop_footer
      %s19 = sadd.s32 1, %s15
    $region7: #{tpu_custom_call.1} parent=1 // loop_footer_branch
      %14 = sbr.rel target = $region3
    $region8: #{tpu_custom_call.1} parent=1 // loop_exit
      _
    %1215 = vsyncpa [#allocation4], 1
    %s1216 = scalar_lea.sflag [#allocation4], 1
    %1217 = vsyncpa %s1216, 1
    %1218 = vsyncpa [#allocation5], 1
    %s1219 = scalar_lea.sflag [#allocation5], 1
    %1220 = vsyncpa %s1219, 1

</llo_original>
